<compile_context>
chip_gen: v6e
topology: v6e:2x2x1
jax: 0.10.0
libtpu: 0.0.40
codegen_flags: <defaults>
</compile_context>

<pallas_src>
import jax
import jax.numpy as jnp
from jax.experimental import pallas as pl
from jax.experimental.pallas import tpu as pltpu

LEAKY_SLOPE = 0.01        # torch.nn.LeakyReLU default
BN_EPS = 1e-5             # torch.nn.BatchNorm1d default
LANE = 128                # lane quantum: pad all hidden widths to this
SINGLE_SHOT_ROWS = 2048   # batches up to this take the grid=() resident path
BATCH_TILE = 2048         # max rows per grid step on the tiled path


def _round_up(x, m):
    return (x + m - 1) // m * m


# ---------------------------------------------------------------------------
# Fused Pallas kernel: entire MLP in one body (layers unrolled at trace time)
# ---------------------------------------------------------------------------
def make_fused_mlp_kernel(n_hidden):
    """Kernel refs: x, (w_0, b_0, ..., w_{L-1}, b_{L-1}), w_head_row, b_head, out.

    Weights are pre-transposed to [in, out] and zero-padded to 128-wide
    outputs; eval BatchNorm is already folded into the following layer, so
    each hidden layer is  x <- leaky_relu(x @ W + b)  and the head is
    sigmoid(sum(x * w_row, -1) + b)  (VPU mul + lane reduce, no MXU N=1 pass).
    """

    def kernel(*refs):
        x_ref = refs[0]
        o_ref = refs[-1]
        x = x_ref[...]                                   # [tile_n, in_f] f32
        idx = 1
        for _ in range(n_hidden):
            w = refs[idx][...]                           # [in_pad, 128k]
            b = refs[idx + 1][...]                       # [1, 128k]
            idx += 2
            y = jnp.dot(x, w, preferred_element_type=jnp.float32) + b
            x = jnp.where(y >= 0, y, LEAKY_SLOPE * y)    # LeakyReLU
            # TODO(synk): Dropout is identity in eval mode; training-mode
            # stochastic dropout / batch statistics are not modeled here.
        w_h = refs[idx][...]                             # [1, fan_in_pad]
        b_h = refs[idx + 1][...]                         # [1, 1]
        y = jnp.sum(x * w_h, axis=-1, keepdims=True) + b_h
        o_ref[...] = jax.nn.sigmoid(y)

    return kernel


# ---------------------------------------------------------------------------
# Wrapper: one pallas_call for the whole forward pass
# ---------------------------------------------------------------------------
def discriminator_forward(x, fused_layers, fused_head):
    """x: [N, in_features] f32. fused_layers: list of (W [in_pad, out_pad],
    b [1, out_pad]). fused_head: (w_row [1, fan_in_pad], b [1, 1]).
    Returns sigmoid logits [N, 1]."""
    n, in_f = x.shape
    flat_inputs = [x]
    for w, b in fused_layers:
        flat_inputs.append(w)
        flat_inputs.append(b)
    hw, hb = fused_head
    flat_inputs.append(hw)
    flat_inputs.append(hb)

    kernel = make_fused_mlp_kernel(len(fused_layers))
    vmem = pltpu.MemorySpace.VMEM

    if n <= SINGLE_SHOT_ROWS:
        # Small / moderate batch: single invocation, everything resident in
        # VMEM, grid=() — no per-step overhead (best on single-TC v5e/v6e).
        in_specs = [pl.BlockSpec(memory_space=vmem) for _ in flat_inputs]
        return pl.pallas_call(
            kernel,
            out_shape=jax.ShapeDtypeStruct((n, 1), jnp.float32),
            in_specs=in_specs,
            out_specs=pl.BlockSpec(memory_space=vmem),
        )(*flat_inputs)

    # Large batch: a few LARGE row tiles over a parallel grid axis.  At most
    # BATCH_TILE rows per step, but never more tiles than necessary (aim for
    # exactly 2 tiles when possible so v7x's two TensorCores each run one).
    tile = min(BATCH_TILE, _round_up(pl.cdiv(n, 2), 8))
    n_tiles = pl.cdiv(n, tile)
    n_pad = n_tiles * tile
    xp = x if n_pad == n else jnp.pad(x, ((0, n_pad - n), (0, 0)))
    flat_inputs[0] = xp

    in_specs = [pl.BlockSpec((tile, in_f), lambda i: (i, 0))]
    for arr in flat_inputs[1:]:
        in_specs.append(pl.BlockSpec(arr.shape, lambda i: (0, 0)))
    out = pl.pallas_call(
        kernel,
        out_shape=jax.ShapeDtypeStruct((n_pad, 1), jnp.float32),
        grid=(n_tiles,),
        in_specs=in_specs,
        out_specs=pl.BlockSpec((tile, 1), lambda i: (i, 0)),
        compiler_params=pltpu.CompilerParams(
            dimension_semantics=("parallel",)),
    )(*flat_inputs)
    return out[:n] if n_pad != n else out


# ---------------------------------------------------------------------------
# Deterministic parameter construction (stand-in for optuna trial + torch init)
# ---------------------------------------------------------------------------
def build_discriminator_params(key, in_features, layer_widths):
    """Returns per-layer param dicts (torch layout) plus head params."""
    params = []
    fan_in = in_features
    for i, out_f in enumerate(layer_widths):
        k = jax.random.fold_in(key, i)
        kw, kb, kg, kbe, km, kv = jax.random.split(k, 6)
        bound = 1.0 / jnp.sqrt(float(fan_in))
        w = jax.random.uniform(kw, (out_f, fan_in), jnp.float32, -bound, bound)
        b = jax.random.uniform(kb, (out_f,), jnp.float32, -bound, bound)
        gamma = 1.0 + 0.1 * jax.random.normal(kg, (out_f,), jnp.float32)
        beta = 0.1 * jax.random.normal(kbe, (out_f,), jnp.float32)
        running_mean = 0.1 * jax.random.normal(km, (out_f,), jnp.float32)
        running_var = 0.5 + jnp.abs(jax.random.normal(kv, (out_f,), jnp.float32))
        # Fold BatchNorm1d (eval) into per-feature scale/shift.
        scale = gamma / jnp.sqrt(running_var + BN_EPS)
        shift = beta - running_mean * scale
        params.append({"w": w, "b": b, "scale": scale, "shift": shift})
        fan_in = out_f
    khw, khb = jax.random.split(jax.random.fold_in(key, 1000))
    bound = 1.0 / jnp.sqrt(float(fan_in))
    head_w = jax.random.uniform(khw, (1, fan_in), jnp.float32, -bound, bound)
    head_b = jax.random.uniform(khb, (1,), jnp.float32, -bound, bound)
    return params, (head_w, head_b)


def fold_pad_transpose_params(params, head, in_features, lane=LANE):
    """Build kernel-ready params ONCE (outside the per-call path):
      * BN(eval) scale/shift of layer i folded into layer i+1's linear
        (and the last hidden BN into the head):
           W'_{i+1} = W_{i+1} * scale_i[None, :]
           b'_{i+1} = b_{i+1} + W_{i+1} @ shift_i
      * weights transposed to [in, out] and zero-padded so every hidden width
        is a multiple of `lane` (lane-dense activations; padded columns stay
        exactly zero through LeakyReLU, so numerics are unchanged),
      * biases padded/reshaped to [1, out_pad],
      * head weight stored as a zero-padded ROW [1, fan_in_pad] for the
        VPU-mul + lane-reduce head (no MXU N=1 pass).
    """
    fused_layers = []
    prev_scale = None
    prev_shift = None
    k_pad = in_features                 # first layer's K is the raw input width
    for p in params:
        w, b = p["w"], p["b"]                       # [out_f, in_f], [out_f]
        out_f, in_f = w.shape
        if prev_scale is not None:
            w = w * prev_scale[None, :]
            b = b + p["w"] @ prev_shift
        out_pad = _round_up(out_f, lane)
        wt_p = jnp.zeros((k_pad, out_pad), jnp.float32)
        wt_p = wt_p.at[:in_f, :out_f].set(jnp.asarray(w.T, jnp.float32))
        b_p = jnp.zeros((1, out_pad), jnp.float32)
        b_p = b_p.at[0, :out_f].set(jnp.asarray(b, jnp.float32))
        fused_layers.append((wt_p, b_p))
        prev_scale, prev_shift = p["scale"], p["shift"]
        k_pad = out_pad
    hw, hb = head                                    # [1, fan_in], [1]
    fan_in = hw.shape[1]
    hw_f = hw * prev_scale[None, :]
    hb_f = hb + hw @ prev_shift
    hw_row = jnp.zeros((1, k_pad), jnp.float32)
    hw_row = hw_row.at[0, :fan_in].set(jnp.asarray(hw_f[0], jnp.float32))
    fused_head = (hw_row, jnp.asarray(hb_f.reshape(1, 1), jnp.float32))
    return fused_layers, fused_head


# ---------------------------------------------------------------------------
# Pure-JAX reference (original, un-folded module semantics)
# ---------------------------------------------------------------------------
def reference_forward(x, params, head):
    for p in params:
        y = x @ p["w"].T + p["b"]
        y = jnp.where(y >= 0, y, LEAKY_SLOPE * y)
        x = y * p["scale"] + p["shift"]
    head_w, head_b = head
    return jax.nn.sigmoid(x @ head_w.T + head_b)


if __name__ == "__main__":
    key = jax.random.PRNGKey(0)

    # Fixed "trial" hyperparameters: n_layers_de = 5, widths in [5, 50].
    in_features_d = 32
    layer_widths = [48, 40, 32, 24, 16]
    batch_small = 8       # grid=() path
    batch_mid = 256       # grid=() path (moderate batch, VMEM resident)
    batch_large = 2500    # tiled path: cdiv grid, padded rows, 2 big tiles

    kx, kx2, kx3, kp = jax.random.split(key, 4)
    x_small = jax.random.normal(kx, (batch_small, in_features_d), jnp.float32)
    x_mid = jax.random.normal(kx2, (batch_mid, in_features_d), jnp.float32)
    x_large = jax.random.normal(kx3, (batch_large, in_features_d), jnp.float32)

    params, head = build_discriminator_params(kp, in_features_d, layer_widths)
    # One-time layout plumbing / BN fold / 128-lane padding (out of hot path).
    fused_layers, fused_head = fold_pad_transpose_params(
        params, head, in_features_d)

    fwd = jax.jit(discriminator_forward)

    # Small batch: single fused pallas_call, grid=().
    out_small = jax.block_until_ready(fwd(x_small, fused_layers, fused_head))
    ref_small = reference_forward(x_small, params, head)
    assert out_small.shape == (batch_small, 1), out_small.shape
    # BN fold reorders float ops; tolerance slightly looser than bit-exact.
    assert jnp.allclose(out_small, ref_small, atol=1e-4, rtol=1e-4)

    # Moderate batch: still grid=() (single-TC chips prefer no grid at all).
    out_mid = jax.block_until_ready(fwd(x_mid, fused_layers, fused_head))
    ref_mid = reference_forward(x_mid, params, head)
    assert out_mid.shape == (batch_mid, 1), out_mid.shape
    assert jnp.allclose(out_mid, ref_mid, atol=1e-4, rtol=1e-4)

    # Large, non-multiple batch: cdiv grid with padded rows + output slice.
    out_large = jax.block_until_ready(fwd(x_large, fused_layers, fused_head))
    ref_large = reference_forward(x_large, params, head)
    assert out_large.shape == (batch_large, 1), out_large.shape
    assert jnp.allclose(out_large, ref_large, atol=1e-4, rtol=1e-4)

    print("KERNEL_OK")
</pallas_src>

<mosaic_0001>
module attributes {stable_mosaic.version = 11 : i64} {
  func.func @kernel(%arg0: memref<8x32xf32, #tpu.memory_space<vmem>>, %arg1: memref<32x128xf32, #tpu.memory_space<vmem>>, %arg2: memref<1x128xf32, #tpu.memory_space<vmem>>, %arg3: memref<128x128xf32, #tpu.memory_space<vmem>>, %arg4: memref<1x128xf32, #tpu.memory_space<vmem>>, %arg5: memref<128x128xf32, #tpu.memory_space<vmem>>, %arg6: memref<1x128xf32, #tpu.memory_space<vmem>>, %arg7: memref<128x128xf32, #tpu.memory_space<vmem>>, %arg8: memref<1x128xf32, #tpu.memory_space<vmem>>, %arg9: memref<128x128xf32, #tpu.memory_space<vmem>>, %arg10: memref<1x128xf32, #tpu.memory_space<vmem>>, %arg11: memref<1x128xf32, #tpu.memory_space<vmem>>, %arg12: memref<1x1xf32, #tpu.memory_space<vmem>>, %arg13: memref<8x1xf32, #tpu.memory_space<vmem>>) attributes {dimension_semantics = [], scalar_prefetch = 0 : i64, scratch_operands = 0 : i64, tpu.core_type = #tpu.core_type<tc>} {
    %c0 = arith.constant 0 : index
    %c0_0 = arith.constant 0 : index
    %0 = vector.load %arg0[%c0, %c0_0] : memref<8x32xf32, #tpu.memory_space<vmem>>, vector<8x32xf32>
    %c0_1 = arith.constant 0 : index
    %c0_2 = arith.constant 0 : index
    %1 = vector.load %arg1[%c0_1, %c0_2] : memref<32x128xf32, #tpu.memory_space<vmem>>, vector<32x128xf32>
    %c0_3 = arith.constant 0 : index
    %c0_4 = arith.constant 0 : index
    %2 = vector.load %arg2[%c0_3, %c0_4] : memref<1x128xf32, #tpu.memory_space<vmem>>, vector<1x128xf32>
    %cst = arith.constant dense<0.000000e+00> : vector<8x128xf32>
    %3 = tpu.matmul %0, %1, %cst {dimension_numbers = #tpu.dot_dimension_numbers<[1], [0], [0], [1], [0, 0, 1, 1], [], []>} : vector<8x32xf32>, vector<32x128xf32>, vector<8x128xf32> -> vector<8x128xf32>
    %4 = vector.broadcast %2 : vector<1x128xf32> to vector<8x128xf32>
    %5 = arith.addf %3, %4 : vector<8x128xf32>
    %cst_5 = arith.constant 0.000000e+00 : f32
    %6 = vector.broadcast %cst_5 : f32 to vector<8x128xf32>
    %7 = arith.cmpf oge, %5, %6 : vector<8x128xf32>
    %cst_6 = arith.constant 0.00999999977 : f32
    %8 = vector.broadcast %cst_6 : f32 to vector<8x128xf32>
    %9 = arith.mulf %8, %5 : vector<8x128xf32>
    %10 = arith.select %7, %5, %9 : vector<8x128xi1>, vector<8x128xf32>
    %c0_7 = arith.constant 0 : index
    %c0_8 = arith.constant 0 : index
    %11 = vector.load %arg3[%c0_7, %c0_8] : memref<128x128xf32, #tpu.memory_space<vmem>>, vector<128x128xf32>
    %c0_9 = arith.constant 0 : index
    %c0_10 = arith.constant 0 : index
    %12 = vector.load %arg4[%c0_9, %c0_10] : memref<1x128xf32, #tpu.memory_space<vmem>>, vector<1x128xf32>
    %cst_11 = arith.constant dense<0.000000e+00> : vector<8x128xf32>
    %13 = tpu.matmul %10, %11, %cst_11 {dimension_numbers = #tpu.dot_dimension_numbers<[1], [0], [0], [1], [0, 0, 1, 1], [], []>} : vector<8x128xf32>, vector<128x128xf32>, vector<8x128xf32> -> vector<8x128xf32>
    %14 = vector.broadcast %12 : vector<1x128xf32> to vector<8x128xf32>
    %15 = arith.addf %13, %14 : vector<8x128xf32>
    %cst_12 = arith.constant 0.000000e+00 : f32
    %16 = vector.broadcast %cst_12 : f32 to vector<8x128xf32>
    %17 = arith.cmpf oge, %15, %16 : vector<8x128xf32>
    %cst_13 = arith.constant 0.00999999977 : f32
    %18 = vector.broadcast %cst_13 : f32 to vector<8x128xf32>
    %19 = arith.mulf %18, %15 : vector<8x128xf32>
    %20 = arith.select %17, %15, %19 : vector<8x128xi1>, vector<8x128xf32>
    %c0_14 = arith.constant 0 : index
    %c0_15 = arith.constant 0 : index
    %21 = vector.load %arg5[%c0_14, %c0_15] : memref<128x128xf32, #tpu.memory_space<vmem>>, vector<128x128xf32>
    %c0_16 = arith.constant 0 : index
    %c0_17 = arith.constant 0 : index
    %22 = vector.load %arg6[%c0_16, %c0_17] : memref<1x128xf32, #tpu.memory_space<vmem>>, vector<1x128xf32>
    %cst_18 = arith.constant dense<0.000000e+00> : vector<8x128xf32>
    %23 = tpu.matmul %20, %21, %cst_18 {dimension_numbers = #tpu.dot_dimension_numbers<[1], [0], [0], [1], [0, 0, 1, 1], [], []>} : vector<8x128xf32>, vector<128x128xf32>, vector<8x128xf32> -> vector<8x128xf32>
    %24 = vector.broadcast %22 : vector<1x128xf32> to vector<8x128xf32>
    %25 = arith.addf %23, %24 : vector<8x128xf32>
    %cst_19 = arith.constant 0.000000e+00 : f32
    %26 = vector.broadcast %cst_19 : f32 to vector<8x128xf32>
    %27 = arith.cmpf oge, %25, %26 : vector<8x128xf32>
    %cst_20 = arith.constant 0.00999999977 : f32
    %28 = vector.broadcast %cst_20 : f32 to vector<8x128xf32>
    %29 = arith.mulf %28, %25 : vector<8x128xf32>
    %30 = arith.select %27, %25, %29 : vector<8x128xi1>, vector<8x128xf32>
    %c0_21 = arith.constant 0 : index
    %c0_22 = arith.constant 0 : index
    %31 = vector.load %arg7[%c0_21, %c0_22] : memref<128x128xf32, #tpu.memory_space<vmem>>, vector<128x128xf32>
    %c0_23 = arith.constant 0 : index
    %c0_24 = arith.constant 0 : index
    %32 = vector.load %arg8[%c0_23, %c0_24] : memref<1x128xf32, #tpu.memory_space<vmem>>, vector<1x128xf32>
    %cst_25 = arith.constant dense<0.000000e+00> : vector<8x128xf32>
    %33 = tpu.matmul %30, %31, %cst_25 {dimension_numbers = #tpu.dot_dimension_numbers<[1], [0], [0], [1], [0, 0, 1, 1], [], []>} : vector<8x128xf32>, vector<128x128xf32>, vector<8x128xf32> -> vector<8x128xf32>
    %34 = vector.broadcast %32 : vector<1x128xf32> to vector<8x128xf32>
    %35 = arith.addf %33, %34 : vector<8x128xf32>
    %cst_26 = arith.constant 0.000000e+00 : f32
    %36 = vector.broadcast %cst_26 : f32 to vector<8x128xf32>
    %37 = arith.cmpf oge, %35, %36 : vector<8x128xf32>
    %cst_27 = arith.constant 0.00999999977 : f32
    %38 = vector.broadcast %cst_27 : f32 to vector<8x128xf32>
    %39 = arith.mulf %38, %35 : vector<8x128xf32>
    %40 = arith.select %37, %35, %39 : vector<8x128xi1>, vector<8x128xf32>
    %c0_28 = arith.constant 0 : index
    %c0_29 = arith.constant 0 : index
    %41 = vector.load %arg9[%c0_28, %c0_29] : memref<128x128xf32, #tpu.memory_space<vmem>>, vector<128x128xf32>
    %c0_30 = arith.constant 0 : index
    %c0_31 = arith.constant 0 : index
    %42 = vector.load %arg10[%c0_30, %c0_31] : memref<1x128xf32, #tpu.memory_space<vmem>>, vector<1x128xf32>
    %cst_32 = arith.constant dense<0.000000e+00> : vector<8x128xf32>
    %43 = tpu.matmul %40, %41, %cst_32 {dimension_numbers = #tpu.dot_dimension_numbers<[1], [0], [0], [1], [0, 0, 1, 1], [], []>} : vector<8x128xf32>, vector<128x128xf32>, vector<8x128xf32> -> vector<8x128xf32>
    %44 = vector.broadcast %42 : vector<1x128xf32> to vector<8x128xf32>
    %45 = arith.addf %43, %44 : vector<8x128xf32>
    %cst_33 = arith.constant 0.000000e+00 : f32
    %46 = vector.broadcast %cst_33 : f32 to vector<8x128xf32>
    %47 = arith.cmpf oge, %45, %46 : vector<8x128xf32>
    %cst_34 = arith.constant 0.00999999977 : f32
    %48 = vector.broadcast %cst_34 : f32 to vector<8x128xf32>
    %49 = arith.mulf %48, %45 : vector<8x128xf32>
    %50 = arith.select %47, %45, %49 : vector<8x128xi1>, vector<8x128xf32>
    %c0_35 = arith.constant 0 : index
    %c0_36 = arith.constant 0 : index
    %51 = vector.load %arg11[%c0_35, %c0_36] : memref<1x128xf32, #tpu.memory_space<vmem>>, vector<1x128xf32>
    %c0_37 = arith.constant 0 : index
    %c0_38 = arith.constant 0 : index
    %52 = vector.load %arg12[%c0_37, %c0_38] : memref<1x1xf32, #tpu.memory_space<vmem>>, vector<1x1xf32>
    %53 = vector.broadcast %51 : vector<1x128xf32> to vector<8x128xf32>
    %54 = arith.mulf %50, %53 : vector<8x128xf32>
    %cst_39 = arith.constant dense<0.000000e+00> : vector<8xf32>
    %55 = vector.multi_reduction <add>, %54, %cst_39 [1] : vector<8x128xf32> to vector<8xf32>
    %56 = vector.shape_cast %55 : vector<8xf32> to vector<8x1xf32>
    %57 = vector.broadcast %52 : vector<1x1xf32> to vector<8x1xf32>
    %58 = arith.addf %56, %57 : vector<8x1xf32>
    %59 = arith.negf %58 : vector<8x1xf32>
    %60 = math.exp %59 : vector<8x1xf32>
    %cst_40 = arith.constant 1.000000e+00 : f32
    %61 = vector.broadcast %cst_40 : f32 to vector<8x1xf32>
    %62 = arith.addf %61, %60 : vector<8x1xf32>
    %63 = arith.divf %61, %62 : vector<8x1xf32>
    %c0_41 = arith.constant 0 : index
    %c0_42 = arith.constant 0 : index
    %64 = vector.load %arg13[%c0_41, %c0_42] : memref<8x1xf32, #tpu.memory_space<vmem>>, vector<8x1xf32>
    tpu.vector_store %arg13[%c0_41, %c0_42], %63 {strides = array<i32>} : memref<8x1xf32, #tpu.memory_space<vmem>>, vector<8x1xf32>,
    return
  }
}

</mosaic_0001>

<llo_original>
// kernel: discriminator_forward.1
$region0: #{discriminator_forward.1}
  #allocation0 [shape = 'u32[]', space=smem, size = 0x4, offset = 0x4, fixed_abs, tag = 'smem constant byte address 0x4 - core index']
  #allocation1 [shape = 'u32[144,128]{1,0:T(1,128)}', space=vmem, size = 0x12000, scoped, tag = 'internal scratch']
  #allocation2 [shape = 'f32[1,1]{1,0:T(1,128)S(1)}', space=vmem, size = 0x200, scoped, tag = 'scoped memory for discriminator_forward.1']
  %s0 = inlined_call_operand.hbm [shape: f32[8,32], index: 0, kind: input, shape index: {}]
  %s1 = inlined_call_operand.hbm [shape: f32[32,128], index: 1, kind: input, shape index: {}]
  %s2 = inlined_call_operand.vmem [shape: f32[1,128], index: 2, kind: input, shape index: {}]
  %s3 = inlined_call_operand.hbm [shape: f32[128,128], index: 3, kind: input, shape index: {}]
  %s4 = inlined_call_operand.vmem [shape: f32[1,128], index: 4, kind: input, shape index: {}]
  %s5 = inlined_call_operand.hbm [shape: f32[128,128], index: 5, kind: input, shape index: {}]
  %s6 = inlined_call_operand.vmem [shape: f32[1,128], index: 6, kind: input, shape index: {}]
  %s7 = inlined_call_operand.hbm [shape: f32[128,128], index: 7, kind: input, shape index: {}]
  %s8 = inlined_call_operand.vmem [shape: f32[1,128], index: 8, kind: input, shape index: {}]
  %s9 = inlined_call_operand.hbm [shape: f32[128,128], index: 9, kind: input, shape index: {}]
  %s10 = inlined_call_operand.vmem [shape: f32[1,128], index: 10, kind: input, shape index: {}]
  %s11 = inlined_call_operand.vmem [shape: f32[1,128], index: 11, kind: input, shape index: {}]
  %s12 = inlined_call_operand.<no memory space> [shape: f32[1,1], index: 12, kind: input, shape index: {}]
  %s13 = inlined_call_operand.vmem [shape: f32[8,1], index: 13, kind: output, shape index: {}]
  %s14 = sld [smem:[#allocation0]]
  $region86: #{discriminator_forward.1} parent=0
    _
  %s16 = ssub.s32 1, %s14
  %s17 = scalar_select 0, %s16, %s14
  %v18 = vstv %s12
  %19 = vst [vmem:[#allocation2] sm:$0x1] %v18
  $region1: #{discriminator_forward.1} parent=0
    #allocation3 [shape = 'u8[4096]{0}', space=vmem, size = 0x1000, scoped, tag = 'input window, operand 0, single buffered']
    #allocation4 [shape = 's32[1]{0}', space=sflag, size = 0x4, scoped, tag = 'scoped memory for discriminator_forward.1']
    #allocation5 [shape = 'u8[16384]{0}', space=vmem, size = 0x4000, scoped, tag = 'input window, operand 1, single buffered']
    #allocation6 [shape = 's32[1]{0}', space=sflag, size = 0x4, scoped, tag = 'scoped memory for discriminator_forward.1']
    #allocation7 [shape = 'u8[65536]{0}', space=vmem, size = 0x10000, scoped, tag = 'input window, operand 3, single buffered']
    #allocation8 [shape = 'u8[65536]{0}', space=vmem, size = 0x10000, scoped, tag = 'input window, operand 5, single buffered']
    #allocation9 [shape = 's32[1]{0}', space=sflag, size = 0x4, scoped, tag = 'scoped memory for discriminator_forward.1']
    #allocation10 [shape = 'u8[65536]{0}', space=vmem, size = 0x10000, scoped, tag = 'input window, operand 7, single buffered']
    #allocation11 [shape = 'u8[65536]{0}', space=vmem, size = 0x10000, scoped, tag = 'input window, operand 9, single buffered']
    #allocation12 [shape = 's32[1]{0}', space=sflag, size = 0x4, scoped, tag = 'scoped memory for discriminator_forward.1']
    %20 = vsyncpa [#allocation4], 0
    %21 = vsyncpa [#allocation6], 0
    %22 = vsyncpa [#allocation9], 0
    %23 = vsyncpa [#allocation12], 0
    // Predicated region
    $region2: #{discriminator_forward.1} parent=1 // pred_check
      _
    $region3: #{discriminator_forward.1} parent=1 // pred_check_branch
      %25 = sbr.rel (0) target = $region5
    $region4: #{discriminator_forward.1} parent=1 // pred_region
      %s27 = ssub.s32 128, 128
      %28 = vsyncadd [#allocation4], %s27
      %s30 = sshll.u32 [#allocation3], 4
      %s31 = int_to_ptr.vmem [resolvable:$true] %s30
      %33 = dma.hbm_to_vmem [thread:$0]  %s0, 128, %s31, [#allocation4]
    $region5: #{discriminator_forward.1} parent=1 // pred_fallthru
      _
    // Predicated region
    $region6: #{discriminator_forward.1} parent=1 // pred_check
      _
    $region7: #{discriminator_forward.1} parent=1 // pred_check_branch
      %35 = sbr.rel (0) target = $region9
    $region8: #{discriminator_forward.1} parent=1 // pred_region
      %s37 = ssub.s32 512, 512
      %38 = vsyncadd [#allocation6], %s37
      %s39 = sshll.u32 [#allocation5], 4
      %s40 = int_to_ptr.vmem [resolvable:$true] %s39
      %45 = dma.hbm_to_vmem [thread:$0]  %s1, 512, %s40, [#allocation6], 128, 128, 8
    $region9: #{discriminator_forward.1} parent=1 // pred_fallthru
      _
    // Predicated region
    $region10: #{discriminator_forward.1} parent=1 // pred_check
      _
    $region11: #{discriminator_forward.1} parent=1 // pred_check_branch
      %47 = sbr.rel (0) target = $region13
    $region12: #{discriminator_forward.1} parent=1 // pred_region
      _
    $region13: #{discriminator_forward.1} parent=1 // pred_fallthru
      _
    // Predicated region
    $region14: #{discriminator_forward.1} parent=1 // pred_check
      _
    $region15: #{discriminator_forward.1} parent=1 // pred_check_branch
      %49 = sbr.rel (0) target = $region17
    $region16: #{discriminator_forward.1} parent=1 // pred_region
      %s51 = ssub.s32 2048, 2048
      %52 = vsyncadd [#allocation6], %s51
      %s53 = sshll.u32 [#allocation7], 4
      %s54 = int_to_ptr.vmem [resolvable:$true] %s53
      %59 = dma.hbm_to_vmem [thread:$0]  %s3, 2048, %s54, [#allocation6], 128, 128, 8
    $region17: #{discriminator_forward.1} parent=1 // pred_fallthru
      _
    // Predicated region
    $region18: #{discriminator_forward.1} parent=1 // pred_check
      _
    $region19: #{discriminator_forward.1} parent=1 // pred_check_branch
      %61 = sbr.rel (0) target = $region21
    $region20: #{discriminator_forward.1} parent=1 // pred_region
      _
    $region21: #{discriminator_forward.1} parent=1 // pred_fallthru
      _
    // Predicated region
    $region22: #{discriminator_forward.1} parent=1 // pred_check
      _
    $region23: #{discriminator_forward.1} parent=1 // pred_check_branch
      %63 = sbr.rel (0) target = $region25
    $region24: #{discriminator_forward.1} parent=1 // pred_region
      %s65 = ssub.s32 2048, 2048
      %66 = vsyncadd [#allocation9], %s65
      %s67 = sshll.u32 [#allocation8], 4
      %s68 = int_to_ptr.vmem [resolvable:$true] %s67
      %73 = dma.hbm_to_vmem [thread:$0]  %s5, 2048, %s68, [#allocation9], 128, 128, 8
    $region25: #{discriminator_forward.1} parent=1 // pred_fallthru
      _
    // Predicated region
    $region26: #{discriminator_forward.1} parent=1 // pred_check
      _
    $region27: #{discriminator_forward.1} parent=1 // pred_check_branch
      %75 = sbr.rel (0) target = $region29
    $region28: #{discriminator_forward.1} parent=1 // pred_region
      _
    $region29: #{discriminator_forward.1} parent=1 // pred_fallthru
      _
    // Predicated region
    $region30: #{discriminator_forward.1} parent=1 // pred_check
      _
    $region31: #{discriminator_forward.1} parent=1 // pred_check_branch
      %77 = sbr.rel (0) target = $region33
    $region32: #{discriminator_forward.1} parent=1 // pred_region
      %s79 = ssub.s32 2048, 2048
      %80 = vsyncadd [#allocation9], %s79
      %s81 = sshll.u32 [#allocation10], 4
      %s82 = int_to_ptr.vmem [resolvable:$true] %s81
      %87 = dma.hbm_to_vmem [thread:$0]  %s7, 2048, %s82, [#allocation9], 128, 128, 8
    $region33: #{discriminator_forward.1} parent=1 // pred_fallthru
      _
    // Predicated region
    $region34: #{discriminator_forward.1} parent=1 // pred_check
      _
    $region35: #{discriminator_forward.1} parent=1 // pred_check_branch
      %89 = sbr.rel (0) target = $region37
    $region36: #{discriminator_forward.1} parent=1 // pred_region
      _
    $region37: #{discriminator_forward.1} parent=1 // pred_fallthru
      _
    // Predicated region
    $region38: #{discriminator_forward.1} parent=1 // pred_check
      _
    $region39: #{discriminator_forward.1} parent=1 // pred_check_branch
      %91 = sbr.rel (0) target = $region41
    $region40: #{discriminator_forward.1} parent=1 // pred_region
      %s93 = ssub.s32 2048, 2048
      %94 = vsyncadd [#allocation12], %s93
      %s95 = sshll.u32 [#allocation11], 4
      %s96 = int_to_ptr.vmem [resolvable:$true] %s95
      %101 = dma.hbm_to_vmem [thread:$0]  %s9, 2048, %s96, [#allocation12], 128, 128, 8
    $region41: #{discriminator_forward.1} parent=1 // pred_fallthru
      _
    // Predicated region
    $region42: #{discriminator_forward.1} parent=1 // pred_check
      _
    $region43: #{discriminator_forward.1} parent=1 // pred_check_branch
      %103 = sbr.rel (0) target = $region45
    $region44: #{discriminator_forward.1} parent=1 // pred_region
      _
    $region45: #{discriminator_forward.1} parent=1 // pred_fallthru
      _
    // Predicated region
    $region46: #{discriminator_forward.1} parent=1 // pred_check
      _
    $region47: #{discriminator_forward.1} parent=1 // pred_check_branch
      %105 = sbr.rel (0) target = $region49
    $region48: #{discriminator_forward.1} parent=1 // pred_region
      _
    $region49: #{discriminator_forward.1} parent=1 // pred_fallthru
      _
    // Predicated region
    $region50: #{discriminator_forward.1} parent=1 // pred_check
      _
    $region51: #{discriminator_forward.1} parent=1 // pred_check_branch
      %107 = sbr.rel (0) target = $region53
    $region52: #{discriminator_forward.1} parent=1 // pred_region
      _
    $region53: #{discriminator_forward.1} parent=1 // pred_fallthru
      _
    // Predicated region
    $region54: #{discriminator_forward.1} parent=1 // pred_check
      _
    $region55: #{discriminator_forward.1} parent=1 // pred_check_branch
      %109 = sbr.rel (0) target = $region57
    $region56: #{discriminator_forward.1} parent=1 // pred_region
      %110 = dma.done [#allocation4], 128
    $region57: #{discriminator_forward.1} parent=1 // pred_fallthru
      _
    // Predicated region
    $region58: #{discriminator_forward.1} parent=1 // pred_check
      _
    $region59: #{discriminator_forward.1} parent=1 // pred_check_branch
      %112 = sbr.rel (0) target = $region61
    $region60: #{discriminator_forward.1} parent=1 // pred_region
      %113 = dma.done [#allocation6], 512
    $region61: #{discriminator_forward.1} parent=1 // pred_fallthru
      _
    // Predicated region
    $region62: #{discriminator_forward.1} parent=1 // pred_check
      _
    $region63: #{discriminator_forward.1} parent=1 // pred_check_branch
      %115 = sbr.rel (0) target = $region65
    $region64: #{discriminator_forward.1} parent=1 // pred_region
      %116 = dma.done [#allocation6], 2048
    $region65: #{discriminator_forward.1} parent=1 // pred_fallthru
      _
    // Predicated region
    $region66: #{discriminator_forward.1} parent=1 // pred_check
      _
    $region67: #{discriminator_forward.1} parent=1 // pred_check_branch
      %118 = sbr.rel (0) target = $region69
    $region68: #{discriminator_forward.1} parent=1 // pred_region
      %119 = dma.done [#allocation9], 2048
    $region69: #{discriminator_forward.1} parent=1 // pred_fallthru
      _
    // Predicated region
    $region70: #{discriminator_forward.1} parent=1 // pred_check
      _
    $region71: #{discriminator_forward.1} parent=1 // pred_check_branch
      %121 = sbr.rel (0) target = $region73
    $region72: #{discriminator_forward.1} parent=1 // pred_region
      %122 = dma.done [#allocation9], 2048
    $region73: #{discriminator_forward.1} parent=1 // pred_fallthru
      _
    // Predicated region
    $region74: #{discriminator_forward.1} parent=1 // pred_check
      _
    $region75: #{discriminator_forward.1} parent=1 // pred_check_branch
      %124 = sbr.rel (0) target = $region77
    $region76: #{discriminator_forward.1} parent=1 // pred_region
      %125 = dma.done [#allocation12], 2048
    $region77: #{discriminator_forward.1} parent=1 // pred_fallthru
      _
    %v126 = vld [vmem:[#allocation3] sm:$0xff]
    %v127 = vld [vmem:[#allocation5] sm:$0xff]
    %v128 = vld [vmem:[#allocation5 + $0x8] sm:$0xff]
    %v129 = vld [vmem:[#allocation5 + $0x10] sm:$0xff]
    %v130 = vld [vmem:[#allocation5 + $0x18] sm:$0xff]
    %v131 = vld [vmem:[%s2] sm:$0x1]
    %v133 = vlaneseq
    %v134 = vshrl.u32 %v133, 7
    %v135 = vsub.s32 0, %v134
    %v136 = vrot.slane %v131, %v135
    %vm138 = vcmask 261120
    %v140 = vsel %vm138, %v126, 0
    %142 = vmatprep.subr.mxu0 0.0
    %143 = vmatpush1.msra.mxu0 0.0
    %144 = vmatprep.subr.mxu0 0.0
    %145 = vmatpush1.msra.mxu0 0.0
    %146 = vmatprep.subr.mxu0 0.0
    %147 = vmatpush1.msra.mxu0 0.0
    %148 = vmatprep.subr.mxu0 0.0
    %149 = vmatpush1.msra.mxu0 0.0
    %150 = vmatprep.subr.mxu0 0.0
    %151 = vmatpush1.msra.mxu0 0.0
    %152 = vmatprep.subr.mxu0 0.0
    %153 = vmatpush1.msra.mxu0 0.0
    %154 = vmatprep.subr.mxu0 0.0
    %155 = vmatpush1.msra.mxu0 0.0
    %156 = vmatprep.subr.mxu0 0.0
    %157 = vmatpush1.msra.mxu0 0.0
    %158 = vmatprep.subr.mxu0 0.0
    %159 = vmatpush1.msra.mxu0 0.0
    %160 = vmatprep.subr.mxu0 0.0
    %161 = vmatpush1.msra.mxu0 0.0
    %162 = vmatprep.subr.mxu0 0.0
    %163 = vmatpush1.msra.mxu0 0.0
    %164 = vmatprep.subr.mxu0 0.0
    %165 = vmatpush1.msra.mxu0 0.0
    %166 = vmatprep.subr.mxu0 0.0
    %167 = vmatpush1.msra.mxu0 %v130
    %168 = vmatprep.subr.mxu0 0.0
    %169 = vmatpush1.msra.mxu0 %v129
    %170 = vmatprep.subr.mxu0 0.0
    %171 = vmatpush1.msra.mxu0 %v128
    %172 = vmatprep.subr.mxu0 0.0
    %173 = vmatpush1.msra.mxu0 %v127
    %174 = vmatprep.subr.mxu0 0.0
    %175 = vmatpush2.msra.mxu0 0.0
    %176 = vmatprep.subr.mxu0 0.0
    %177 = vmatpush2.msra.mxu0 0.0
    %178 = vmatprep.subr.mxu0 0.0
    %179 = vmatpush2.msra.mxu0 0.0
    %180 = vmatprep.subr.mxu0 0.0
    %181 = vmatpush2.msra.mxu0 0.0
    %182 = vmatprep.subr.mxu0 0.0
    %183 = vmatpush2.msra.mxu0 0.0
    %184 = vmatprep.subr.mxu0 0.0
    %185 = vmatpush2.msra.mxu0 0.0
    %186 = vmatprep.subr.mxu0 0.0
    %187 = vmatpush2.msra.mxu0 0.0
    %188 = vmatprep.subr.mxu0 0.0
    %189 = vmatpush2.msra.mxu0 0.0
    %190 = vmatprep.subr.mxu0 0.0
    %191 = vmatpush2.msra.mxu0 0.0
    %192 = vmatprep.subr.mxu0 0.0
    %193 = vmatpush2.msra.mxu0 0.0
    %194 = vmatprep.subr.mxu0 0.0
    %195 = vmatpush2.msra.mxu0 0.0
    %196 = vmatprep.subr.mxu0 0.0
    %197 = vmatpush2.msra.mxu0 0.0
    %198 = vmatprep.subr.mxu0 0.0
    %199 = vmatpush2.msra.mxu0 0.0
    %200 = vmatprep.subr.mxu0 0.0
    %201 = vmatpush2.msra.mxu0 0.0
    %202 = vmatprep.subr.mxu0 0.0
    %203 = vmatpush2.msra.mxu0 0.0
    %204 = vmatprep.subr.mxu0 0.0
    %205 = vmatpush2.msra.mxu0 0.0
    %206 = vmatprep.mubr.f32.mxu0 0.0
    %207 = vmatmul.mubr.f32.gmra.mxu0 %v140
    %v208 = vpop.f32.mrf.mxu0
    %v209 = vadd.f32 %v136, %v208
    %v210 = vpop.f32.mrf.mxu0
    %211 = vdwg.mxu0
    %vm212 = vcmp.ge.f32.partialorder %v209, 0.0
    %v213 = vmul.f32 %v209, 0.01
    %v214 = vsel %vm212, %v209, %v213
    %v215 = vld [vmem:[#allocation7] sm:$0xff]
    %v216 = vld [vmem:[#allocation7 + $0x8] sm:$0xff]
    %v217 = vld [vmem:[#allocation7 + $0x10] sm:$0xff]
    %v218 = vld [vmem:[#allocation7 + $0x18] sm:$0xff]
    %v219 = vld [vmem:[#allocation7 + $0x20] sm:$0xff]
    %v220 = vld [vmem:[#allocation7 + $0x28] sm:$0xff]
    %v221 = vld [vmem:[#allocation7 + $0x30] sm:$0xff]
    %v222 = vld [vmem:[#allocation7 + $0x38] sm:$0xff]
    %v223 = vld [vmem:[#allocation7 + $0x40] sm:$0xff]
    %v224 = vld [vmem:[#allocation7 + $0x48] sm:$0xff]
    %v225 = vld [vmem:[#allocation7 + $0x50] sm:$0xff]
    %v226 = vld [vmem:[#allocation7 + $0x58] sm:$0xff]
    %v227 = vld [vmem:[#allocation7 + $0x60] sm:$0xff]
    %v228 = vld [vmem:[#allocation7 + $0x68] sm:$0xff]
    %v229 = vld [vmem:[#allocation7 + $0x70] sm:$0xff]
    %v230 = vld [vmem:[#allocation7 + $0x78] sm:$0xff]
    %v231 = vld [vmem:[%s4] sm:$0x1]
    %v233 = vlaneseq
    %v234 = vshrl.u32 %v233, 7
    %v235 = vsub.s32 0, %v234
    %v236 = vrot.slane %v231, %v235
    %238 = vmatprep.subr.mxu0 0.0
    %239 = vmatpush1.msra.mxu0 %v230
    %240 = vmatprep.subr.mxu0 0.0
    %241 = vmatpush1.msra.mxu0 %v229
    %242 = vmatprep.subr.mxu0 0.0
    %243 = vmatpush1.msra.mxu0 %v228
    %244 = vmatprep.subr.mxu0 0.0
    %245 = vmatpush1.msra.mxu0 %v227
    %246 = vmatprep.subr.mxu0 0.0
    %247 = vmatpush1.msra.mxu0 %v226
    %248 = vmatprep.subr.mxu0 0.0
    %249 = vmatpush1.msra.mxu0 %v225
    %250 = vmatprep.subr.mxu0 0.0
    %251 = vmatpush1.msra.mxu0 %v224
    %252 = vmatprep.subr.mxu0 0.0
    %253 = vmatpush1.msra.mxu0 %v223
    %254 = vmatprep.subr.mxu0 0.0
    %255 = vmatpush1.msra.mxu0 %v222
    %256 = vmatprep.subr.mxu0 0.0
    %257 = vmatpush1.msra.mxu0 %v221
    %258 = vmatprep.subr.mxu0 0.0
    %259 = vmatpush1.msra.mxu0 %v220
    %260 = vmatprep.subr.mxu0 0.0
    %261 = vmatpush1.msra.mxu0 %v219
    %262 = vmatprep.subr.mxu0 0.0
    %263 = vmatpush1.msra.mxu0 %v218
    %264 = vmatprep.subr.mxu0 0.0
    %265 = vmatpush1.msra.mxu0 %v217
    %266 = vmatprep.subr.mxu0 0.0
    %267 = vmatpush1.msra.mxu0 %v216
    %268 = vmatprep.subr.mxu0 0.0
    %269 = vmatpush1.msra.mxu0 %v215
    %270 = vmatprep.subr.mxu0 0.0
    %271 = vmatpush2.msra.mxu0 0.0
    %272 = vmatprep.subr.mxu0 0.0
    %273 = vmatpush2.msra.mxu0 0.0
    %274 = vmatprep.subr.mxu0 0.0
    %275 = vmatpush2.msra.mxu0 0.0
    %276 = vmatprep.subr.mxu0 0.0
    %277 = vmatpush2.msra.mxu0 0.0
    %278 = vmatprep.subr.mxu0 0.0
    %279 = vmatpush2.msra.mxu0 0.0
    %280 = vmatprep.subr.mxu0 0.0
    %281 = vmatpush2.msra.mxu0 0.0
    %282 = vmatprep.subr.mxu0 0.0
    %283 = vmatpush2.msra.mxu0 0.0
    %284 = vmatprep.subr.mxu0 0.0
    %285 = vmatpush2.msra.mxu0 0.0
    %286 = vmatprep.subr.mxu0 0.0
    %287 = vmatpush2.msra.mxu0 0.0
    %288 = vmatprep.subr.mxu0 0.0
    %289 = vmatpush2.msra.mxu0 0.0
    %290 = vmatprep.subr.mxu0 0.0
    %291 = vmatpush2.msra.mxu0 0.0
    %292 = vmatprep.subr.mxu0 0.0
    %293 = vmatpush2.msra.mxu0 0.0
    %294 = vmatprep.subr.mxu0 0.0
    %295 = vmatpush2.msra.mxu0 0.0
    %296 = vmatprep.subr.mxu0 0.0
    %297 = vmatpush2.msra.mxu0 0.0
    %298 = vmatprep.subr.mxu0 0.0
    %299 = vmatpush2.msra.mxu0 0.0
    %300 = vmatprep.subr.mxu0 0.0
    %301 = vmatpush2.msra.mxu0 0.0
    %302 = vmatprep.mubr.f32.mxu0 0.0
    %303 = vmatmul.mubr.f32.gmra.mxu0 %v214
    %v304 = vpop.f32.mrf.mxu0
    %v305 = vadd.f32 %v236, %v304
    %v306 = vpop.f32.mrf.mxu0
    %307 = vdwg.mxu0
    %vm308 = vcmp.ge.f32.partialorder %v305, 0.0
    %v309 = vmul.f32 %v305, 0.01
    %v310 = vsel %vm308, %v305, %v309
    %v311 = vld [vmem:[#allocation8] sm:$0xff]
    %v312 = vld [vmem:[#allocation8 + $0x8] sm:$0xff]
    %v313 = vld [vmem:[#allocation8 + $0x10] sm:$0xff]
    %v314 = vld [vmem:[#allocation8 + $0x18] sm:$0xff]
    %v315 = vld [vmem:[#allocation8 + $0x20] sm:$0xff]
    %v316 = vld [vmem:[#allocation8 + $0x28] sm:$0xff]
    %v317 = vld [vmem:[#allocation8 + $0x30] sm:$0xff]
    %v318 = vld [vmem:[#allocation8 + $0x38] sm:$0xff]
    %v319 = vld [vmem:[#allocation8 + $0x40] sm:$0xff]
    %v320 = vld [vmem:[#allocation8 + $0x48] sm:$0xff]
    %v321 = vld [vmem:[#allocation8 + $0x50] sm:$0xff]
    %v322 = vld [vmem:[#allocation8 + $0x58] sm:$0xff]
    %v323 = vld [vmem:[#allocation8 + $0x60] sm:$0xff]
    %v324 = vld [vmem:[#allocation8 + $0x68] sm:$0xff]
    %v325 = vld [vmem:[#allocation8 + $0x70] sm:$0xff]
    %v326 = vld [vmem:[#allocation8 + $0x78] sm:$0xff]
    %v327 = vld [vmem:[%s6] sm:$0x1]
    %v329 = vlaneseq
    %v330 = vshrl.u32 %v329, 7
    %v331 = vsub.s32 0, %v330
    %v332 = vrot.slane %v327, %v331
    %334 = vmatprep.subr.mxu0 0.0
    %335 = vmatpush1.msra.mxu0 %v326
    %336 = vmatprep.subr.mxu0 0.0
    %337 = vmatpush1.msra.mxu0 %v325
    %338 = vmatprep.subr.mxu0 0.0
    %339 = vmatpush1.msra.mxu0 %v324
    %340 = vmatprep.subr.mxu0 0.0
    %341 = vmatpush1.msra.mxu0 %v323
    %342 = vmatprep.subr.mxu0 0.0
    %343 = vmatpush1.msra.mxu0 %v322
    %344 = vmatprep.subr.mxu0 0.0
    %345 = vmatpush1.msra.mxu0 %v321
    %346 = vmatprep.subr.mxu0 0.0
    %347 = vmatpush1.msra.mxu0 %v320
    %348 = vmatprep.subr.mxu0 0.0
    %349 = vmatpush1.msra.mxu0 %v319
    %350 = vmatprep.subr.mxu0 0.0
    %351 = vmatpush1.msra.mxu0 %v318
    %352 = vmatprep.subr.mxu0 0.0
    %353 = vmatpush1.msra.mxu0 %v317
    %354 = vmatprep.subr.mxu0 0.0
    %355 = vmatpush1.msra.mxu0 %v316
    %356 = vmatprep.subr.mxu0 0.0
    %357 = vmatpush1.msra.mxu0 %v315
    %358 = vmatprep.subr.mxu0 0.0
    %359 = vmatpush1.msra.mxu0 %v314
    %360 = vmatprep.subr.mxu0 0.0
    %361 = vmatpush1.msra.mxu0 %v313
    %362 = vmatprep.subr.mxu0 0.0
    %363 = vmatpush1.msra.mxu0 %v312
    %364 = vmatprep.subr.mxu0 0.0
    %365 = vmatpush1.msra.mxu0 %v311
    %366 = vmatprep.subr.mxu0 0.0
    %367 = vmatpush2.msra.mxu0 0.0
    %368 = vmatprep.subr.mxu0 0.0
    %369 = vmatpush2.msra.mxu0 0.0
    %370 = vmatprep.subr.mxu0 0.0
    %371 = vmatpush2.msra.mxu0 0.0
    %372 = vmatprep.subr.mxu0 0.0
    %373 = vmatpush2.msra.mxu0 0.0
    %374 = vmatprep.subr.mxu0 0.0
    %375 = vmatpush2.msra.mxu0 0.0
    %376 = vmatprep.subr.mxu0 0.0
    %377 = vmatpush2.msra.mxu0 0.0
    %378 = vmatprep.subr.mxu0 0.0
    %379 = vmatpush2.msra.mxu0 0.0
    %380 = vmatprep.subr.mxu0 0.0
    %381 = vmatpush2.msra.mxu0 0.0
    %382 = vmatprep.subr.mxu0 0.0
    %383 = vmatpush2.msra.mxu0 0.0
    %384 = vmatprep.subr.mxu0 0.0
    %385 = vmatpush2.msra.mxu0 0.0
    %386 = vmatprep.subr.mxu0 0.0
    %387 = vmatpush2.msra.mxu0 0.0
    %388 = vmatprep.subr.mxu0 0.0
    %389 = vmatpush2.msra.mxu0 0.0
    %390 = vmatprep.subr.mxu0 0.0
    %391 = vmatpush2.msra.mxu0 0.0
    %392 = vmatprep.subr.mxu0 0.0
    %393 = vmatpush2.msra.mxu0 0.0
    %394 = vmatprep.subr.mxu0 0.0
    %395 = vmatpush2.msra.mxu0 0.0
    %396 = vmatprep.subr.mxu0 0.0
    %397 = vmatpush2.msra.mxu0 0.0
    %398 = vmatprep.mubr.f32.mxu0 0.0
    %399 = vmatmul.mubr.f32.gmra.mxu0 %v310
    %v400 = vpop.f32.mrf.mxu0
    %v401 = vadd.f32 %v332, %v400
    %v402 = vpop.f32.mrf.mxu0
    %403 = vdwg.mxu0
    %vm404 = vcmp.ge.f32.partialorder %v401, 0.0
    %v405 = vmul.f32 %v401, 0.01
    %v406 = vsel %vm404, %v401, %v405
    %v407 = vld [vmem:[#allocation10] sm:$0xff]
    %v408 = vld [vmem:[#allocation10 + $0x8] sm:$0xff]
    %v409 = vld [vmem:[#allocation10 + $0x10] sm:$0xff]
    %v410 = vld [vmem:[#allocation10 + $0x18] sm:$0xff]
    %v411 = vld [vmem:[#allocation10 + $0x20] sm:$0xff]
    %v412 = vld [vmem:[#allocation10 + $0x28] sm:$0xff]
    %v413 = vld [vmem:[#allocation10 + $0x30] sm:$0xff]
    %v414 = vld [vmem:[#allocation10 + $0x38] sm:$0xff]
    %v415 = vld [vmem:[#allocation10 + $0x40] sm:$0xff]
    %v416 = vld [vmem:[#allocation10 + $0x48] sm:$0xff]
    %v417 = vld [vmem:[#allocation10 + $0x50] sm:$0xff]
    %v418 = vld [vmem:[#allocation10 + $0x58] sm:$0xff]
    %v419 = vld [vmem:[#allocation10 + $0x60] sm:$0xff]
    %v420 = vld [vmem:[#allocation10 + $0x68] sm:$0xff]
    %v421 = vld [vmem:[#allocation10 + $0x70] sm:$0xff]
    %v422 = vld [vmem:[#allocation10 + $0x78] sm:$0xff]
    %v423 = vld [vmem:[%s8] sm:$0x1]
    %v425 = vlaneseq
    %v426 = vshrl.u32 %v425, 7
    %v427 = vsub.s32 0, %v426
    %v428 = vrot.slane %v423, %v427
    %430 = vmatprep.subr.mxu0 0.0
    %431 = vmatpush1.msra.mxu0 %v422
    %432 = vmatprep.subr.mxu0 0.0
    %433 = vmatpush1.msra.mxu0 %v421
    %434 = vmatprep.subr.mxu0 0.0
    %435 = vmatpush1.msra.mxu0 %v420
    %436 = vmatprep.subr.mxu0 0.0
    %437 = vmatpush1.msra.mxu0 %v419
    %438 = vmatprep.subr.mxu0 0.0
    %439 = vmatpush1.msra.mxu0 %v418
    %440 = vmatprep.subr.mxu0 0.0
    %441 = vmatpush1.msra.mxu0 %v417
    %442 = vmatprep.subr.mxu0 0.0
    %443 = vmatpush1.msra.mxu0 %v416
    %444 = vmatprep.subr.mxu0 0.0
    %445 = vmatpush1.msra.mxu0 %v415
    %446 = vmatprep.subr.mxu0 0.0
    %447 = vmatpush1.msra.mxu0 %v414
    %448 = vmatprep.subr.mxu0 0.0
    %449 = vmatpush1.msra.mxu0 %v413
    %450 = vmatprep.subr.mxu0 0.0
    %451 = vmatpush1.msra.mxu0 %v412
    %452 = vmatprep.subr.mxu0 0.0
    %453 = vmatpush1.msra.mxu0 %v411
    %454 = vmatprep.subr.mxu0 0.0
    %455 = vmatpush1.msra.mxu0 %v410
    %456 = vmatprep.subr.mxu0 0.0
    %457 = vmatpush1.msra.mxu0 %v409
    %458 = vmatprep.subr.mxu0 0.0
    %459 = vmatpush1.msra.mxu0 %v408
    %460 = vmatprep.subr.mxu0 0.0
    %461 = vmatpush1.msra.mxu0 %v407
    %462 = vmatprep.subr.mxu0 0.0
    %463 = vmatpush2.msra.mxu0 0.0
    %464 = vmatprep.subr.mxu0 0.0
    %465 = vmatpush2.msra.mxu0 0.0
    %466 = vmatprep.subr.mxu0 0.0
    %467 = vmatpush2.msra.mxu0 0.0
    %468 = vmatprep.subr.mxu0 0.0
    %469 = vmatpush2.msra.mxu0 0.0
    %470 = vmatprep.subr.mxu0 0.0
    %471 = vmatpush2.msra.mxu0 0.0
    %472 = vmatprep.subr.mxu0 0.0
    %473 = vmatpush2.msra.mxu0 0.0
    %474 = vmatprep.subr.mxu0 0.0
    %475 = vmatpush2.msra.mxu0 0.0
    %476 = vmatprep.subr.mxu0 0.0
    %477 = vmatpush2.msra.mxu0 0.0
    %478 = vmatprep.subr.mxu0 0.0
    %479 = vmatpush2.msra.mxu0 0.0
    %480 = vmatprep.subr.mxu0 0.0
    %481 = vmatpush2.msra.mxu0 0.0
    %482 = vmatprep.subr.mxu0 0.0
    %483 = vmatpush2.msra.mxu0 0.0
    %484 = vmatprep.subr.mxu0 0.0
    %485 = vmatpush2.msra.mxu0 0.0
    %486 = vmatprep.subr.mxu0 0.0
    %487 = vmatpush2.msra.mxu0 0.0
    %488 = vmatprep.subr.mxu0 0.0
    %489 = vmatpush2.msra.mxu0 0.0
    %490 = vmatprep.subr.mxu0 0.0
    %491 = vmatpush2.msra.mxu0 0.0
    %492 = vmatprep.subr.mxu0 0.0
    %493 = vmatpush2.msra.mxu0 0.0
    %494 = vmatprep.mubr.f32.mxu0 0.0
    %495 = vmatmul.mubr.f32.gmra.mxu0 %v406
    %v496 = vpop.f32.mrf.mxu0
    %v497 = vadd.f32 %v428, %v496
    %v498 = vpop.f32.mrf.mxu0
    %499 = vdwg.mxu0
    %vm500 = vcmp.ge.f32.partialorder %v497, 0.0
    %v501 = vmul.f32 %v497, 0.01
    %v502 = vsel %vm500, %v497, %v501
    %v503 = vld [vmem:[#allocation11] sm:$0xff]
    %v504 = vld [vmem:[#allocation11 + $0x8] sm:$0xff]
    %v505 = vld [vmem:[#allocation11 + $0x10] sm:$0xff]
    %v506 = vld [vmem:[#allocation11 + $0x18] sm:$0xff]
    %v507 = vld [vmem:[#allocation11 + $0x20] sm:$0xff]
    %v508 = vld [vmem:[#allocation11 + $0x28] sm:$0xff]
    %v509 = vld [vmem:[#allocation11 + $0x30] sm:$0xff]
    %v510 = vld [vmem:[#allocation11 + $0x38] sm:$0xff]
    %v511 = vld [vmem:[#allocation11 + $0x40] sm:$0xff]
    %v512 = vld [vmem:[#allocation11 + $0x48] sm:$0xff]
    %v513 = vld [vmem:[#allocation11 + $0x50] sm:$0xff]
    %v514 = vld [vmem:[#allocation11 + $0x58] sm:$0xff]
    %v515 = vld [vmem:[#allocation11 + $0x60] sm:$0xff]
    %v516 = vld [vmem:[#allocation11 + $0x68] sm:$0xff]
    %v517 = vld [vmem:[#allocation11 + $0x70] sm:$0xff]
    %v518 = vld [vmem:[#allocation11 + $0x78] sm:$0xff]
    %v519 = vld [vmem:[%s10] sm:$0x1]
    %v521 = vlaneseq
    %v522 = vshrl.u32 %v521, 7
    %v523 = vsub.s32 0, %v522
    %v524 = vrot.slane %v519, %v523
    %526 = vmatprep.subr.mxu0 0.0
    %527 = vmatpush1.msra.mxu0 %v518
    %528 = vmatprep.subr.mxu0 0.0
    %529 = vmatpush1.msra.mxu0 %v517
    %530 = vmatprep.subr.mxu0 0.0
    %531 = vmatpush1.msra.mxu0 %v516
    %532 = vmatprep.subr.mxu0 0.0
    %533 = vmatpush1.msra.mxu0 %v515
    %534 = vmatprep.subr.mxu0 0.0
    %535 = vmatpush1.msra.mxu0 %v514
    %536 = vmatprep.subr.mxu0 0.0
    %537 = vmatpush1.msra.mxu0 %v513
    %538 = vmatprep.subr.mxu0 0.0
    %539 = vmatpush1.msra.mxu0 %v512
    %540 = vmatprep.subr.mxu0 0.0
    %541 = vmatpush1.msra.mxu0 %v511
    %542 = vmatprep.subr.mxu0 0.0
    %543 = vmatpush1.msra.mxu0 %v510
    %544 = vmatprep.subr.mxu0 0.0
    %545 = vmatpush1.msra.mxu0 %v509
    %546 = vmatprep.subr.mxu0 0.0
    %547 = vmatpush1.msra.mxu0 %v508
    %548 = vmatprep.subr.mxu0 0.0
    %549 = vmatpush1.msra.mxu0 %v507
    %550 = vmatprep.subr.mxu0 0.0
    %551 = vmatpush1.msra.mxu0 %v506
    %552 = vmatprep.subr.mxu0 0.0
    %553 = vmatpush1.msra.mxu0 %v505
    %554 = vmatprep.subr.mxu0 0.0
    %555 = vmatpush1.msra.mxu0 %v504
    %556 = vmatprep.subr.mxu0 0.0
    %557 = vmatpush1.msra.mxu0 %v503
    %558 = vmatprep.subr.mxu0 0.0
    %559 = vmatpush2.msra.mxu0 0.0
    %560 = vmatprep.subr.mxu0 0.0
    %561 = vmatpush2.msra.mxu0 0.0
    %562 = vmatprep.subr.mxu0 0.0
    %563 = vmatpush2.msra.mxu0 0.0
    %564 = vmatprep.subr.mxu0 0.0
    %565 = vmatpush2.msra.mxu0 0.0
    %566 = vmatprep.subr.mxu0 0.0
    %567 = vmatpush2.msra.mxu0 0.0
    %568 = vmatprep.subr.mxu0 0.0
    %569 = vmatpush2.msra.mxu0 0.0
    %570 = vmatprep.subr.mxu0 0.0
    %571 = vmatpush2.msra.mxu0 0.0
    %572 = vmatprep.subr.mxu0 0.0
    %573 = vmatpush2.msra.mxu0 0.0
    %574 = vmatprep.subr.mxu0 0.0
    %575 = vmatpush2.msra.mxu0 0.0
    %576 = vmatprep.subr.mxu0 0.0
    %577 = vmatpush2.msra.mxu0 0.0
    %578 = vmatprep.subr.mxu0 0.0
    %579 = vmatpush2.msra.mxu0 0.0
    %580 = vmatprep.subr.mxu0 0.0
    %581 = vmatpush2.msra.mxu0 0.0
    %582 = vmatprep.subr.mxu0 0.0
    %583 = vmatpush2.msra.mxu0 0.0
    %584 = vmatprep.subr.mxu0 0.0
    %585 = vmatpush2.msra.mxu0 0.0
    %586 = vmatprep.subr.mxu0 0.0
    %587 = vmatpush2.msra.mxu0 0.0
    %588 = vmatprep.subr.mxu0 0.0
    %589 = vmatpush2.msra.mxu0 0.0
    %590 = vmatprep.mubr.f32.mxu0 0.0
    %591 = vmatmul.mubr.f32.gmra.mxu0 %v502
    %v592 = vpop.f32.mrf.mxu0
    %v593 = vadd.f32 %v524, %v592
    %v594 = vpop.f32.mrf.mxu0
    %595 = vdwg.mxu0
    %vm596 = vcmp.ge.f32.partialorder %v593, 0.0
    %v597 = vmul.f32 %v593, 0.01
    %v598 = vsel %vm596, %v593, %v597
    %v599 = vld [vmem:[%s11] sm:$0x1]
    %v600 = vld [vmem:[#allocation2] sm:$0x1]
    %v602 = vlaneseq
    %v603 = vshrl.u32 %v602, 7
    %v604 = vsub.s32 0, %v603
    %v605 = vrot.slane %v599, %v604
    %v607 = vmul.f32 %v598, %v605
    %608 = vadd.xlane.f32.xlu0 %v607
    %v609 = vpop.xlane.xlu0 %608
    %v611 = vlaneseq
    %v612 = vshrl.u32 %v611, 7
    %v613 = vsub.s32 0, %v612
    %v614 = vrot.slane %v600, %v613
    %v616 = vadd.f32 %v609, %v614
    %v617 = vxor.u32 %v616, 2147483648
    %v618 = vmul.f32 %v617, 1.442695
    %v619 = vpow.pop %v618
    %v620 = vadd.f32 %v619, 1.0
    %v621 = vrcp.pop %v620
    %v622 = vmul.f32 1.0, %v621
    %vm623 = vcmask 7168
    %624 = vst.msk [vmem:[%s13] sm:$0xff] %vm623, %v622
    // Predicated region
    $region78: #{discriminator_forward.1} parent=1 // pred_check
      _
    $region79: #{discriminator_forward.1} parent=1 // pred_check_branch
      %626 = sbr.rel (0) target = $region81
    $region80: #{discriminator_forward.1} parent=1 // pred_region
      _
    $region81: #{discriminator_forward.1} parent=1 // pred_fallthru
      _
    // Predicated region
    $region82: #{discriminator_forward.1} parent=1 // pred_check
      _
    $region83: #{discriminator_forward.1} parent=1 // pred_check_branch
      %628 = sbr.rel (0) target = $region85
    $region84: #{discriminator_forward.1} parent=1 // pred_region
      _
    $region85: #{discriminator_forward.1} parent=1 // pred_fallthru
      _
    %629 = vsyncpa [#allocation4], 1
    %630 = vsyncpa [#allocation6], 1
    %631 = vsyncpa [#allocation9], 1
    %632 = vsyncpa [#allocation12], 1

</llo_original>
